<compile_context>
chip_gen: v6e
topology: v6e:2x2x1
jax: 0.10.0
libtpu: 0.0.40
codegen_flags: <defaults>
</compile_context>

<pallas_src>
import functools

import jax
import jax.numpy as jnp
from jax.experimental import pallas as pl
from jax.experimental.pallas import tpu as pltpu


# ---------------------------------------------------------------------------
# Kernels
# ---------------------------------------------------------------------------

def _fused_inplace_kernel(x_ref, wkj_ref, wjk_ref, b_ref, o_ref):
    """tm >= 128, f32 output: accumulate directly into the resident o block."""
    k = pl.program_id(2)

    @pl.when(k == 0)
    def _init():
        o_ref[...] = jnp.zeros_like(o_ref)

    # sym_W[k-blk, j-blk] = 0.5 * (W[k-blk, j-blk] + W[j-blk, k-blk].T);
    # the 0.5 is deferred to the O(tm*tn) finalize.
    w_tile = wkj_ref[...] + wjk_ref[...].T
    o_ref[...] += jnp.dot(x_ref[...], w_tile,
                          preferred_element_type=jnp.float32)

    @pl.when(k == pl.num_programs(2) - 1)
    def _finalize():
        o_ref[...] = 0.5 * o_ref[...] + b_ref[...]


def _fused_scratch_kernel(x_ref, wkj_ref, wjk_ref, b_ref, o_ref, acc_ref):
    """tm >= 128, non-f32 output: f32 VMEM accumulator, cast at finalize."""
    k = pl.program_id(2)

    @pl.when(k == 0)
    def _init():
        acc_ref[...] = jnp.zeros_like(acc_ref)

    w_tile = wkj_ref[...] + wjk_ref[...].T
    acc_ref[...] += jnp.dot(x_ref[...], w_tile,
                            preferred_element_type=jnp.float32)

    @pl.when(k == pl.num_programs(2) - 1)
    def _finalize():
        o_ref[...] = (0.5 * acc_ref[...] + b_ref[...]).astype(o_ref.dtype)


def _split_kernel(x_ref, wkj_ref, wjk_ref, b_ref, o_ref, acc_ref, accT_ref):
    """tm < 128: avoid the per-step (tk, tn) weight transpose (vxpose shares
    the vector-extended slot with vmatmul and dominates at tiny tm).  Use two
    accumulators; only the small (tm, tk) x tile is transposed per step and
    the (tn, tm) accumulator once, at finalize."""
    k = pl.program_id(2)

    @pl.when(k == 0)
    def _init():
        acc_ref[...] = jnp.zeros_like(acc_ref)
        accT_ref[...] = jnp.zeros_like(accT_ref)

    x = x_ref[...]
    # out[i, j] gets x @ W[k, j]  (the "W" half of sym(W)) ...
    acc_ref[...] += jnp.dot(x, wkj_ref[...],
                            preferred_element_type=jnp.float32)
    # ... and (W[j, k] @ x.T).T == x @ W[j, k].T  (the "W.T" half).
    accT_ref[...] += jnp.dot(wjk_ref[...], x.T,
                             preferred_element_type=jnp.float32)

    @pl.when(k == pl.num_programs(2) - 1)
    def _finalize():
        o_ref[...] = (0.5 * (acc_ref[...] + accT_ref[...].T)
                      + b_ref[...]).astype(o_ref.dtype)


# ---------------------------------------------------------------------------
# Wrapper
# ---------------------------------------------------------------------------

def _largest_aligned_divisor(dim, cap, align):
    """Largest divisor of `dim` that is <= cap and a multiple of `align`;
    falls back to the full extent (full-extent blocks always satisfy the
    (8, 128) tiling rule)."""
    cap = min(cap, dim)
    for d in range(cap, 0, -1):
        if dim % d == 0 and d % align == 0:
            return d
    return dim


@functools.lru_cache(maxsize=1)
def _derived_vmem_limit_bytes():
    cap = 64 * 1024 * 1024  # conservative default: v7x has 64 MiB / TensorCore
    try:
        info = pltpu.get_tpu_info()
        cap = int(getattr(info, "vmem_capacity_bytes", cap))
    except Exception:
        pass
    # ~25% headroom for Mosaic-internal scratch and pipeline bookkeeping.
    return max(32 * 1024 * 1024, (cap * 3) // 4)


def pe_linear(x, weight, bias, *, tm=512, tn=512, tk=512):
    """x: (B, F), weight: (F, F), bias: (F,) -> x @ (0.5*(W + W.T)) + bias."""
    B, F = x.shape
    assert weight.shape == (F, F), weight.shape
    assert bias.shape == (F,), bias.shape

    # Tile selection: grow tm first (W is re-streamed from HBM B/tm times);
    # tn/tk default to 512 (lane-dense, >= the 256-wide MXU of v6e/v7x,
    # ~12 MiB total VMEM with double-buffering -- safe on all generations;
    # v7x (64 MiB VMEM) users sweeping upward should stay <= ~1024 for f32).
    tm = _largest_aligned_divisor(B, tm, 8)
    tn = _largest_aligned_divisor(F, tn, 128)
    tk = _largest_aligned_divisor(F, tk, 128)

    # v7x has 2 TensorCores per chip: keep >= 2 blocks across the "parallel"
    # grid axes so the second core is not idle.
    if (B // tm) * (F // tn) < 2:
        tn_half = _largest_aligned_divisor(F, tn // 2, 128)
        if 128 <= tn_half < tn:
            tn = tn_half

    grid = (B // tm, F // tn, F // tk)
    bias2d = bias.reshape(1, F)

    in_specs = [
        pl.BlockSpec((tm, tk), lambda i, j, k: (i, k)),   # x[i-blk, k-blk]
        pl.BlockSpec((tk, tn), lambda i, j, k: (k, j)),   # W[k-blk, j-blk]
        pl.BlockSpec((tn, tk), lambda i, j, k: (j, k)),   # W[j-blk, k-blk]
        pl.BlockSpec((1, tn), lambda i, j, k: (0, j)),    # bias[0, j-blk]
    ]
    out_spec = pl.BlockSpec((tm, tn), lambda i, j, k: (i, j))

    if tm >= 128:
        if x.dtype == jnp.float32:
            kernel, scratch = _fused_inplace_kernel, []
        else:
            kernel = _fused_scratch_kernel
            scratch = [pltpu.VMEM((tm, tn), jnp.float32)]
        flops = 2 * B * F * F
    else:
        kernel = _split_kernel
        scratch = [pltpu.VMEM((tm, tn), jnp.float32),
                   pltpu.VMEM((tn, tm), jnp.float32)]
        flops = 4 * B * F * F  # two matmuls per tile in the small-batch path

    bytes_accessed = int(
        B * F * x.dtype.itemsize * (F // tn)           # x re-read per j block
        + 2 * F * F * weight.dtype.itemsize * (B // tm)  # W streamed twice / i
        + F * bias.dtype.itemsize * (B // tm)            # bias
        + B * F * x.dtype.itemsize)                      # output write

    return pl.pallas_call(
        kernel,
        out_shape=jax.ShapeDtypeStruct((B, F), x.dtype),
        grid_spec=pltpu.PrefetchScalarGridSpec(
            num_scalar_prefetch=0,
            grid=grid,
            in_specs=in_specs,
            out_specs=out_spec,
            scratch_shapes=scratch,
        ),
        compiler_params=pltpu.CompilerParams(
            dimension_semantics=("parallel", "parallel", "arbitrary"),
            vmem_limit_bytes=_derived_vmem_limit_bytes(),
        ),
        cost_estimate=pl.CostEstimate(
            flops=int(flops), transcendentals=0,
            bytes_accessed=bytes_accessed),
    )(x, weight, weight, bias2d)


# ---------------------------------------------------------------------------
# Harness
# ---------------------------------------------------------------------------

if __name__ == "__main__":
    key = jax.random.PRNGKey(0)
    kx, kw, kx2 = jax.random.split(key, 3)

    features = 256  # lane-dense (multiple of 128)

    # Deterministic init mirroring the PyTorch module:
    #   weight ~ randn(features, features), bias = zeros(features)
    weight = jax.random.normal(kw, (features, features), dtype=jnp.float32)
    bias = jnp.zeros((features,), dtype=jnp.float32)
    sym_w = (weight + weight.T) / 2

    # Small-batch path (split kernel, no per-step weight transpose).
    batch = 8
    x = jax.random.normal(kx, (batch, features), dtype=jnp.float32)
    out = jax.block_until_ready(pe_linear(x, weight, bias))
    ref = x @ sym_w + bias
    assert out.shape == (batch, features)
    assert jnp.allclose(out, ref, atol=1e-3, rtol=1e-4), float(
        jnp.max(jnp.abs(out - ref)))

    # Larger-batch path (fused per-tile symmetrization, in-place f32 accumulate).
    batch2 = 128
    x2 = jax.random.normal(kx2, (batch2, features), dtype=jnp.float32)
    out2 = jax.block_until_ready(pe_linear(x2, weight, bias))
    ref2 = x2 @ sym_w + bias
    assert out2.shape == (batch2, features)
    assert jnp.allclose(out2, ref2, atol=1e-3, rtol=1e-4), float(
        jnp.max(jnp.abs(out2 - ref2)))

    print("KERNEL_OK")
</pallas_src>

<mosaic_0001>
module attributes {stable_mosaic.version = 11 : i64} {
  func.func @_split_kernel(%arg0: i32, %arg1: i32, %arg2: i32, %arg3: memref<8x256xf32, #tpu.memory_space<vmem>>, %arg4: memref<256x128xf32, #tpu.memory_space<vmem>>, %arg5: memref<128x256xf32, #tpu.memory_space<vmem>>, %arg6: memref<1x128xf32, #tpu.memory_space<vmem>>, %arg7: memref<8x128xf32, #tpu.memory_space<vmem>>, %arg8: memref<8x128xf32, #tpu.memory_space<vmem>>, %arg9: memref<128x8xf32, #tpu.memory_space<vmem>>) attributes {dimension_semantics = [#tpu.dimension_semantics<parallel>, #tpu.dimension_semantics<parallel>, #tpu.dimension_semantics<arbitrary>], iteration_bounds = array<i64: 1, 2, 1>, scalar_prefetch = 0 : i64, scratch_operands = 2 : i64, tpu.core_type = #tpu.core_type<tc>, window_params = [{transform_indices = @transform_0, window_bounds = array<i64: 8, 256>}, {transform_indices = @transform_1, window_bounds = array<i64: 256, 128>}, {transform_indices = @transform_2, window_bounds = array<i64: 128, 256>}, {transform_indices = @transform_3, window_bounds = array<i64: 1, 128>}, {transform_indices = @transform_4, window_bounds = array<i64: 8, 128>}]} {
    %c0_i32 = arith.constant 0 : i32
    %0 = arith.cmpi eq, %arg2, %c0_i32 : i32
    %1 = arith.extui %0 : i1 to i32
    %c0_i32_0 = arith.constant 0 : i32
    %2 = arith.cmpi ne, %1, %c0_i32_0 : i32
    scf.if %2 {
      %cst_17 = arith.constant 0.000000e+00 : f32
      %18 = vector.broadcast %cst_17 : f32 to vector<8x128xf32>
      %c0_18 = arith.constant 0 : index
      %c0_19 = arith.constant 0 : index
      %19 = vector.load %arg8[%c0_18, %c0_19] : memref<8x128xf32, #tpu.memory_space<vmem>>, vector<8x128xf32>
      tpu.vector_store %arg8[%c0_18, %c0_19], %18 {strides = array<i32>} : memref<8x128xf32, #tpu.memory_space<vmem>>, vector<8x128xf32>,
      %cst_20 = arith.constant 0.000000e+00 : f32
      %20 = vector.broadcast %cst_20 : f32 to vector<128x8xf32>
      %c0_21 = arith.constant 0 : index
      %c0_22 = arith.constant 0 : index
      %21 = vector.load %arg9[%c0_21, %c0_22] : memref<128x8xf32, #tpu.memory_space<vmem>>, vector<128x8xf32>
      tpu.vector_store %arg9[%c0_21, %c0_22], %20 {strides = array<i32>} : memref<128x8xf32, #tpu.memory_space<vmem>>, vector<128x8xf32>,
    } else {
    }
    %c0 = arith.constant 0 : index
    %c0_1 = arith.constant 0 : index
    %3 = vector.load %arg3[%c0, %c0_1] : memref<8x256xf32, #tpu.memory_space<vmem>>, vector<8x256xf32>
    %c0_2 = arith.constant 0 : index
    %c0_3 = arith.constant 0 : index
    %4 = vector.load %arg8[%c0_2, %c0_3] : memref<8x128xf32, #tpu.memory_space<vmem>>, vector<8x128xf32>
    %c0_4 = arith.constant 0 : index
    %c0_5 = arith.constant 0 : index
    %5 = vector.load %arg4[%c0_4, %c0_5] : memref<256x128xf32, #tpu.memory_space<vmem>>, vector<256x128xf32>
    %cst = arith.constant dense<0.000000e+00> : vector<8x128xf32>
    %6 = tpu.matmul %3, %5, %cst {dimension_numbers = #tpu.dot_dimension_numbers<[1], [0], [0], [1], [0, 0, 1, 1], [], []>} : vector<8x256xf32>, vector<256x128xf32>, vector<8x128xf32> -> vector<8x128xf32>
    %7 = arith.addf %4, %6 : vector<8x128xf32>
    %c0_6 = arith.constant 0 : index
    %c0_7 = arith.constant 0 : index
    %8 = vector.load %arg8[%c0_6, %c0_7] : memref<8x128xf32, #tpu.memory_space<vmem>>, vector<8x128xf32>
    tpu.vector_store %arg8[%c0_6, %c0_7], %7 {strides = array<i32>} : memref<8x128xf32, #tpu.memory_space<vmem>>, vector<8x128xf32>,
    %c0_8 = arith.constant 0 : index
    %c0_9 = arith.constant 0 : index
    %9 = vector.load %arg9[%c0_8, %c0_9] : memref<128x8xf32, #tpu.memory_space<vmem>>, vector<128x8xf32>
    %c0_10 = arith.constant 0 : index
    %c0_11 = arith.constant 0 : index
    %10 = vector.load %arg5[%c0_10, %c0_11] : memref<128x256xf32, #tpu.memory_space<vmem>>, vector<128x256xf32>
    %11 = tpu.transpose %3, [1, 0] : vector<8x256xf32> -> vector<256x8xf32>
    %cst_12 = arith.constant dense<0.000000e+00> : vector<128x8xf32>
    %12 = tpu.matmul %10, %11, %cst_12 {dimension_numbers = #tpu.dot_dimension_numbers<[1], [0], [0], [1], [0, 0, 1, 1], [], []>} : vector<128x256xf32>, vector<256x8xf32>, vector<128x8xf32> -> vector<128x8xf32>
    %13 = arith.addf %9, %12 : vector<128x8xf32>
    %c0_13 = arith.constant 0 : index
    %c0_14 = arith.constant 0 : index
    %14 = vector.load %arg9[%c0_13, %c0_14] : memref<128x8xf32, #tpu.memory_space<vmem>>, vector<128x8xf32>
    tpu.vector_store %arg9[%c0_13, %c0_14], %13 {strides = array<i32>} : memref<128x8xf32, #tpu.memory_space<vmem>>, vector<128x8xf32>,
    %c0_i32_15 = arith.constant 0 : i32
    %15 = arith.cmpi eq, %arg2, %c0_i32_15 : i32
    %16 = arith.extui %15 : i1 to i32
    %c0_i32_16 = arith.constant 0 : i32
    %17 = arith.cmpi ne, %16, %c0_i32_16 : i32
    scf.if %17 {
      %c0_17 = arith.constant 0 : index
      %c0_18 = arith.constant 0 : index
      %18 = vector.load %arg8[%c0_17, %c0_18] : memref<8x128xf32, #tpu.memory_space<vmem>>, vector<8x128xf32>
      %c0_19 = arith.constant 0 : index
      %c0_20 = arith.constant 0 : index
      %19 = vector.load %arg9[%c0_19, %c0_20] : memref<128x8xf32, #tpu.memory_space<vmem>>, vector<128x8xf32>
      %20 = tpu.transpose %19, [1, 0] : vector<128x8xf32> -> vector<8x128xf32>
      %21 = arith.addf %18, %20 : vector<8x128xf32>
      %cst_21 = arith.constant 5.000000e-01 : f32
      %22 = vector.broadcast %cst_21 : f32 to vector<8x128xf32>
      %23 = arith.mulf %22, %21 : vector<8x128xf32>
      %c0_22 = arith.constant 0 : index
      %c0_23 = arith.constant 0 : index
      %24 = vector.load %arg6[%c0_22, %c0_23] : memref<1x128xf32, #tpu.memory_space<vmem>>, vector<1x128xf32>
      %25 = vector.broadcast %24 : vector<1x128xf32> to vector<8x128xf32>
      %26 = arith.addf %23, %25 : vector<8x128xf32>
      %c0_24 = arith.constant 0 : index
      %c0_25 = arith.constant 0 : index
      %27 = vector.load %arg7[%c0_24, %c0_25] : memref<8x128xf32, #tpu.memory_space<vmem>>, vector<8x128xf32>
      tpu.vector_store %arg7[%c0_24, %c0_25], %26 {strides = array<i32>} : memref<8x128xf32, #tpu.memory_space<vmem>>, vector<8x128xf32>,
    } else {
    }
    return
  }
  func.func @transform_0(%arg0: i32, %arg1: i32, %arg2: i32) -> (i32, i32) {
    %c0_i32 = arith.constant 0 : i32
    return %arg0, %arg2 : i32, i32
  }
  func.func @transform_1(%arg0: i32, %arg1: i32, %arg2: i32) -> (i32, i32) {
    %c0_i32 = arith.constant 0 : i32
    return %arg2, %arg1 : i32, i32
  }
  func.func @transform_2(%arg0: i32, %arg1: i32, %arg2: i32) -> (i32, i32) {
    %c0_i32 = arith.constant 0 : i32
    return %arg1, %arg2 : i32, i32
  }
  func.func @transform_3(%arg0: i32, %arg1: i32, %arg2: i32) -> (i32, i32) {
    %c0_i32 = arith.constant 0 : i32
    %c0_i32_0 = arith.constant 0 : i32
    return %c0_i32, %arg1 : i32, i32
  }
  func.func @transform_4(%arg0: i32, %arg1: i32, %arg2: i32) -> (i32, i32) {
    %c0_i32 = arith.constant 0 : i32
    return %arg0, %arg1 : i32, i32
  }
}

</mosaic_0001>

<llo_original>
// kernel: tpu_custom_call.1
$region0: #{tpu_custom_call.1}
  #allocation0 [shape = 'u32[]', space=smem, size = 0x4, offset = 0x4, fixed_abs, tag = 'smem constant byte address 0x4 - core index']
  #allocation1 [shape = 'u32[144,128]{1,0:T(1,128)}', space=vmem, size = 0x12000, scoped, tag = 'internal scratch']
  #allocation2 [shape = 'f32[8,128]{1,0:T(8,128)}', space=vmem, size = 0x1000, scoped, tag = 'scratch operand']
  #allocation3 [shape = 'f32[128,8]{1,0:T(8,128)}', space=vmem, size = 0x10000, scoped, tag = 'scratch operand']
  %s0 = inlined_call_operand.hbm [shape: f32[8,256], index: 0, kind: input, shape index: {}]
  %s1 = inlined_call_operand.hbm [shape: f32[256,256], index: 1, kind: input, shape index: {}]
  %s2 = inlined_call_operand.hbm [shape: f32[256,256], index: 2, kind: input, shape index: {}]
  %s3 = inlined_call_operand.vmem [shape: f32[1,256], index: 3, kind: input, shape index: {}]
  %s4 = inlined_call_operand.hbm [shape: f32[8,256], index: 4, kind: output, shape index: {}]
  %s5 = sld [smem:[#allocation0]]
  $region69: #{tpu_custom_call.1} parent=0
    _
  %s7 = ssub.s32 1, %s5
  %s8 = scalar_select 0, %s7, %s5
  $region1: #{tpu_custom_call.1} parent=0
    #allocation4 [shape = 'u8[8192]{0}', space=vmem, size = 0x2000, scoped, tag = 'input window, operand 0, single buffered']
    #allocation5 [shape = 's32[2]{0}', space=sflag, size = 0x8, scoped, tag = 'scoped memory for tpu_custom_call.1']
    #allocation6 [shape = 's32[2]{0}', space=sflag, size = 0x8, scoped, tag = 'scoped memory for tpu_custom_call.1']
    #allocation7 [shape = 'u8[262144]{0}', space=vmem, size = 0x40000, scoped, tag = 'input window, operand 1']
    #allocation8 [shape = 's32[2]{0}', space=sflag, size = 0x8, scoped, tag = 'scoped memory for tpu_custom_call.1']
    #allocation9 [shape = 'u8[262144]{0}', space=vmem, size = 0x40000, scoped, tag = 'input window, operand 2']
    #allocation10 [shape = 'u8[8192]{0}', space=vmem, size = 0x2000, scoped, tag = 'output window, operand 0']
    %9 = vsyncpa [#allocation5], 0
    %10 = vsyncpa [#allocation8], 0
    %s11 = scalar_lea.sflag [#allocation8], 1
    %12 = vsyncpa %s11, 0
    %13 = vsyncpa [#allocation6], 0
    %s14 = scalar_lea.sflag [#allocation6], 1
    %15 = vsyncpa %s14, 0
    loop: start=0, step=1, limit=4
    $region2: #{tpu_custom_call.1} parent=1 // loop_pre_header
      _
    $region3: #{tpu_custom_call.1} parent=1 // loop_header
      %s17 = sphi 0, %s21
      %p18 = scmp.ge.s32.totalorder %s17, 4
      %s24 = sphi 0, %s43
      %s25 = sphi 0, %s39
      %s26 = sphi 0, %s35
      %s27 = sphi 0, %s24
      %s28 = sphi 0, %s25
      %s29 = sphi 0, %s26
      %s30 = sphi 0, %s27
      %s31 = sphi 0, %s28
      %s32 = sphi 0, %s29
      %s48 = sphi 0, %s50
      %s51 = sphi 0, %s48
      %s52 = sphi 0, %s51
      %s68 = sphi 0, %s52
      %s76 = sphi 0, %s78
      %s79 = sphi 0, %s76
      %s80 = sphi 0, %s79
      %s96 = sphi 0, %s80
      %s104 = sphi 0, %s106
      %s107 = sphi 0, %s104
      %s108 = sphi 0, %s107
      %s124 = sphi 0, %s108
      %s130 = sphi 0, %s132
      %s133 = sphi 0, %s130
      %s134 = sphi 0, %s133
      %s150 = sphi 0, %s134
      %s158 = sphi 0, %s160
      %s161 = sphi 0, %s158
      %s162 = sphi 0, %s161
      %s178 = sphi 0, %s162
    $region4: #{tpu_custom_call.1} parent=1 // loop_header_branch
      %20 = sbr.rel (%p18) target = $region8
    $region5: #{tpu_custom_call.1} parent=1 // loop_body
      %s22 = ssub.s32 %s17, 1
      %s23 = ssub.s32 %s17, 2
      %s33 = sadd.s32 1, %s26
      %p34 = scmp.ge.s32.totalorder %s33, 1
      %s35 = scalar_select %p34, 0, %s33
      %s36 = sadd.s32 1, %s25
      %s37 = scalar_select %p34, %s36, %s25
      %p38 = scmp.ge.s32.totalorder %s37, 2
      %s39 = scalar_select %p38, 0, %s37
      %s40 = sadd.s32 1, %s24
      %s41 = scalar_select %p38, %s40, %s24
      %p42 = scmp.ge.s32.totalorder %s41, 1
      %s43 = scalar_select %p42, 0, %s41
      %s44 = ssub.s32 %s24, %s43
      %s45 = ssub.s32 %s26, %s35
      %s46 = sor.u32 %s44, %s45
      %p47 = scmp.eq.s32.totalorder %s46, 0
      %s49 = sadd.s32 %s48, 1
      %s50 = scalar_select %p47, %s48, %s49
      %p53 = pneg %p47
      %p54 = scmp.eq.s32.totalorder %s17, 1
      %p55 = por %p53, %p54
      %p56 = scmp.ne.s32.totalorder %s48, %s51
      %p57 = scmp.eq.s32.totalorder %s17, 0
      %p58 = por %p56, %p57
      %p59 = scmp.ne.s32.totalorder %s48, %s51
      %p60 = scmp.eq.s32.totalorder %s22, 1
      %p61 = por %p59, %p60
      %p62 = scmp.ne.s32.totalorder %s51, %s52
      %p63 = scmp.eq.s32.totalorder %s22, 0
      %p64 = por %p62, %p63
      %p65 = scmp.ne.s32.totalorder %s51, %s52
      %p66 = scmp.eq.s32.totalorder %s23, 1
      %p67 = por %p65, %p66
      %p69 = scmp.ne.s32.totalorder %s52, %s68
      %p70 = scmp.eq.s32.totalorder %s23, 0
      %p71 = por %p69, %p70
      %s72 = ssub.s32 %s26, %s35
      %s73 = ssub.s32 %s25, %s39
      %s74 = sor.u32 %s72, %s73
      %p75 = scmp.eq.s32.totalorder %s74, 0
      %s77 = sadd.s32 %s76, 1
      %s78 = scalar_select %p75, %s76, %s77
      %p81 = pneg %p75
      %p82 = scmp.eq.s32.totalorder %s17, 1
      %p83 = por %p81, %p82
      %p84 = scmp.ne.s32.totalorder %s76, %s79
      %p85 = scmp.eq.s32.totalorder %s17, 0
      %p86 = por %p84, %p85
      %p87 = scmp.ne.s32.totalorder %s76, %s79
      %p88 = scmp.eq.s32.totalorder %s22, 1
      %p89 = por %p87, %p88
      %p90 = scmp.ne.s32.totalorder %s79, %s80
      %p91 = scmp.eq.s32.totalorder %s22, 0
      %p92 = por %p90, %p91
      %p93 = scmp.ne.s32.totalorder %s79, %s80
      %p94 = scmp.eq.s32.totalorder %s23, 1
      %p95 = por %p93, %p94
      %p97 = scmp.ne.s32.totalorder %s80, %s96
      %p98 = scmp.eq.s32.totalorder %s23, 0
      %p99 = por %p97, %p98
      %s100 = ssub.s32 %s25, %s39
      %s101 = ssub.s32 %s26, %s35
      %s102 = sor.u32 %s100, %s101
      %p103 = scmp.eq.s32.totalorder %s102, 0
      %s105 = sadd.s32 %s104, 1
      %s106 = scalar_select %p103, %s104, %s105
      %p109 = pneg %p103
      %p110 = scmp.eq.s32.totalorder %s17, 1
      %p111 = por %p109, %p110
      %p112 = scmp.ne.s32.totalorder %s104, %s107
      %p113 = scmp.eq.s32.totalorder %s17, 0
      %p114 = por %p112, %p113
      %p115 = scmp.ne.s32.totalorder %s104, %s107
      %p116 = scmp.eq.s32.totalorder %s22, 1
      %p117 = por %p115, %p116
      %p118 = scmp.ne.s32.totalorder %s107, %s108
      %p119 = scmp.eq.s32.totalorder %s22, 0
      %p120 = por %p118, %p119
      %p121 = scmp.ne.s32.totalorder %s107, %s108
      %p122 = scmp.eq.s32.totalorder %s23, 1
      %p123 = por %p121, %p122
      %p125 = scmp.ne.s32.totalorder %s108, %s124
      %p126 = scmp.eq.s32.totalorder %s23, 0
      %p127 = por %p125, %p126
      %s128 = ssub.s32 %s25, %s39
      %p129 = scmp.eq.s32.totalorder %s128, 0
      %s131 = sadd.s32 %s130, 1
      %s132 = scalar_select %p129, %s130, %s131
      %p135 = pneg %p129
      %p136 = scmp.eq.s32.totalorder %s17, 1
      %p137 = por %p135, %p136
      %p138 = scmp.ne.s32.totalorder %s130, %s133
      %p139 = scmp.eq.s32.totalorder %s17, 0
      %p140 = por %p138, %p139
      %p141 = scmp.ne.s32.totalorder %s130, %s133
      %p142 = scmp.eq.s32.totalorder %s22, 1
      %p143 = por %p141, %p142
      %p144 = scmp.ne.s32.totalorder %s133, %s134
      %p145 = scmp.eq.s32.totalorder %s22, 0
      %p146 = por %p144, %p145
      %p147 = scmp.ne.s32.totalorder %s133, %s134
      %p148 = scmp.eq.s32.totalorder %s23, 1
      %p149 = por %p147, %p148
      %p151 = scmp.ne.s32.totalorder %s134, %s150
      %p152 = scmp.eq.s32.totalorder %s23, 0
      %p153 = por %p151, %p152
      %s154 = ssub.s32 %s24, %s43
      %s155 = ssub.s32 %s25, %s39
      %s156 = sor.u32 %s154, %s155
      %p157 = scmp.eq.s32.totalorder %s156, 0
      %s159 = sadd.s32 %s158, 1
      %s160 = scalar_select %p157, %s158, %s159
      %p163 = pneg %p157
      %p164 = scmp.eq.s32.totalorder %s17, 1
      %p165 = por %p163, %p164
      %p166 = scmp.ne.s32.totalorder %s158, %s161
      %p167 = scmp.eq.s32.totalorder %s17, 0
      %p168 = por %p166, %p167
      %p169 = scmp.ne.s32.totalorder %s158, %s161
      %p170 = scmp.eq.s32.totalorder %s22, 1
      %p171 = por %p169, %p170
      %p172 = scmp.ne.s32.totalorder %s161, %s162
      %p173 = scmp.eq.s32.totalorder %s22, 0
      %p174 = por %p172, %p173
      %p175 = scmp.ne.s32.totalorder %s161, %s162
      %p176 = scmp.eq.s32.totalorder %s23, 1
      %p177 = por %p175, %p176
      %p179 = scmp.ne.s32.totalorder %s162, %s178
      %p180 = scmp.eq.s32.totalorder %s23, 0
      %p181 = por %p179, %p180
      %p182 = scmp.le.s32.totalorder 1, %s17
      %p183 = scmp.lt.s32.totalorder %s17, 3
      %p184 = pnand %p182, %p183
      %p185 = pneg %p184
      // Predicated region
      $region9: #{tpu_custom_call.1} parent=5 // pred_check
        _
      $region10: #{tpu_custom_call.1} parent=5 // pred_check_branch
        %187 = sbr.rel (%p184) target = $region12
      $region11: #{tpu_custom_call.1} parent=5 // pred_region
        %s188 = ssub.s32 %s17, 1
        // Predicated region
        $region13: #{tpu_custom_call.1} parent=11 // pred_check
          %p189 = pneg %p64
        $region14: #{tpu_custom_call.1} parent=11 // pred_check_branch
          %191 = sbr.rel (%p189) target = $region16
        $region15: #{tpu_custom_call.1} parent=11 // pred_region
          %s192 = smul.u32 2, %s29
          %s194 = ssub.s32 256, 256
          %195 = vsyncadd [#allocation5], %s194
          %s196 = smul.addr %s27, 2
          %s197 = sadd.s32 %s192, %s196
          %s198 = smul.addr %s197, 128
          %s199 = scalar_lea.hbm %s0, %s198
          %s201 = sshll.u32 [#allocation4], 4
          %s202 = int_to_ptr.vmem [resolvable:$true] %s201
          %204 = dma.hbm_to_vmem [thread:$0]  %s199, 256, %s202, [#allocation5]
        $region16: #{tpu_custom_call.1} parent=11 // pred_fallthru
          _
      $region12: #{tpu_custom_call.1} parent=5 // pred_fallthru
        _
      %p205 = scmp.lt.s32.totalorder %s17, 2
      // Predicated region
      $region17: #{tpu_custom_call.1} parent=5 // pred_check
        %p206 = pneg %p205
      $region18: #{tpu_custom_call.1} parent=5 // pred_check_branch
        %208 = sbr.rel (%p206) target = $region20
      $region19: #{tpu_custom_call.1} parent=5 // pred_region
        // Predicated region
        $region21: #{tpu_custom_call.1} parent=19 // pred_check
          %p209 = pneg %p86
        $region22: #{tpu_custom_call.1} parent=19 // pred_check_branch
          %211 = sbr.rel (%p209) target = $region24
        $region23: #{tpu_custom_call.1} parent=19 // pred_region
          %s212 = sand.u32 %s17, 1
          %s213 = scalar_lea.sflag [#allocation8], %s212
          %s214 = sand.u32 %s76, 1
          %s215 = smul.addr %s214, 256
          %s216 = scalar_lea.vmem [#allocation7], %s215
          %s217 = smul.u32 32, %s26
          %s219 = ssub.s32 4096, 4096
          %220 = vsyncadd %s213, %s219
          %s221 = smul.addr %s217, 2
          %s222 = sadd.s32 %s25, %s221
          %s223 = smul.addr %s222, 128
          %s224 = scalar_lea.hbm %s1, %s223
          %s225 = sshll.u32 %s216, 4
          %s226 = int_to_ptr.vmem [resolvable:$true] %s225
          %231 = dma.hbm_to_vmem [thread:$0]  %s224, 4096, %s226, %s213, 256, 128, 8
        $region24: #{tpu_custom_call.1} parent=19 // pred_fallthru
          _
        // Predicated region
        $region25: #{tpu_custom_call.1} parent=19 // pred_check
          %p232 = pneg %p114
        $region26: #{tpu_custom_call.1} parent=19 // pred_check_branch
          %234 = sbr.rel (%p232) target = $region28
        $region27: #{tpu_custom_call.1} parent=19 // pred_region
          %s235 = sand.u32 %s17, 1
          %s236 = scalar_lea.sflag [#allocation8], %s235
          %s237 = sand.u32 %s104, 1
          %s238 = smul.addr %s237, 256
          %s239 = scalar_lea.vmem [#allocation9], %s238
          %s240 = smul.u32 16, %s25
          %s241 = smul.u32 2, %s26
          %s243 = ssub.s32 4096, 4096
          %244 = vsyncadd %s236, %s243
          %s245 = smul.addr %s240, 2
          %s246 = sadd.s32 %s241, %s245
          %s247 = smul.addr %s246, 128
          %s248 = scalar_lea.hbm %s2, %s247
          %s249 = sshll.u32 %s239, 4
          %s250 = int_to_ptr.vmem [resolvable:$true] %s249
          %255 = dma.hbm_to_vmem [thread:$0]  %s248, 4096, %s250, %s236, 256, 256, 16
        $region28: #{tpu_custom_call.1} parent=19 // pred_fallthru
          _
        // Predicated region
        $region29: #{tpu_custom_call.1} parent=19 // pred_check
          %p256 = pneg %p140
        $region30: #{tpu_custom_call.1} parent=19 // pred_check_branch
          %258 = sbr.rel (%p256) target = $region32
        $region31: #{tpu_custom_call.1} parent=19 // pred_region
          %p259 = scmp.lt.s32.totalorder %s25, 1
          %s260 = scalar_select %p259, %s25, 1
          %s261 = scalar_lea.vmem %s3, %s260
        $region32: #{tpu_custom_call.1} parent=19 // pred_fallthru
          _
      $region20: #{tpu_custom_call.1} parent=5 // pred_fallthru
        _
      %p262 = scmp.le.s32.totalorder 1, %s17
      %p263 = scmp.lt.s32.totalorder %s17, 3
      %p264 = pnand %p262, %p263
      %p265 = pneg %p264
      // Predicated region
      $region33: #{tpu_custom_call.1} parent=5 // pred_check
        _
      $region34: #{tpu_custom_call.1} parent=5 // pred_check_branch
        %267 = sbr.rel (%p264) target = $region36
      $region35: #{tpu_custom_call.1} parent=5 // pred_region
        %s268 = ssub.s32 %s17, 1
        // Predicated region
        $region37: #{tpu_custom_call.1} parent=35 // pred_check
          %p269 = pneg %p64
        $region38: #{tpu_custom_call.1} parent=35 // pred_check_branch
          %271 = sbr.rel (%p269) target = $region40
        $region39: #{tpu_custom_call.1} parent=35 // pred_region
          %272 = dma.done [#allocation5], 256
        $region40: #{tpu_custom_call.1} parent=35 // pred_fallthru
          _
        %s273 = sand.u32 %s22, 1
        %s274 = scalar_lea.sflag [#allocation8], %s273
        %s275 = sand.u32 %s79, 1
        %s276 = smul.addr %s275, 256
        %s277 = scalar_lea.vmem [#allocation7], %s276
        // Predicated region
        $region41: #{tpu_custom_call.1} parent=35 // pred_check
          %p278 = pneg %p92
        $region42: #{tpu_custom_call.1} parent=35 // pred_check_branch
          %280 = sbr.rel (%p278) target = $region44
        $region43: #{tpu_custom_call.1} parent=35 // pred_region
          %281 = dma.done %s274, 4096
        $region44: #{tpu_custom_call.1} parent=35 // pred_fallthru
          _
        %s282 = sand.u32 %s22, 1
        %s283 = scalar_lea.sflag [#allocation8], %s282
        %s284 = sand.u32 %s107, 1
        %s285 = smul.addr %s284, 256
        %s286 = scalar_lea.vmem [#allocation9], %s285
        // Predicated region
        $region45: #{tpu_custom_call.1} parent=35 // pred_check
          %p287 = pneg %p120
        $region46: #{tpu_custom_call.1} parent=35 // pred_check_branch
          %289 = sbr.rel (%p287) target = $region48
        $region47: #{tpu_custom_call.1} parent=35 // pred_region
          %290 = dma.done %s283, 4096
        $region48: #{tpu_custom_call.1} parent=35 // pred_fallthru
          _
        %p291 = pneg %p64
        %p292 = pneg %p61
        %s293 = sand.u32 %s22, 1
        %s294 = scalar_lea.sflag [#allocation8], %s293
        %s295 = sand.u32 %s79, 1
        %s296 = smul.addr %s295, 256
        %s297 = scalar_lea.vmem [#allocation7], %s296
        %p298 = pneg %p92
        %p299 = pneg %p89
        %s300 = sand.u32 %s22, 1
        %s301 = scalar_lea.sflag [#allocation8], %s300
        %s302 = sand.u32 %s107, 1
        %s303 = smul.addr %s302, 256
        %s304 = scalar_lea.vmem [#allocation9], %s303
        %p305 = pneg %p120
        %p306 = pneg %p117
        %p307 = scmp.lt.s32.totalorder %s28, 1
        %s308 = scalar_select %p307, %s28, 1
        %s309 = scalar_lea.vmem %s3, %s308
        %p310 = pneg %p146
        %p311 = pneg %p143
        %p312 = pneg %p174
        %p313 = pneg %p171
        %s314 = sand.u32 %s161, 1
        %s315 = scalar_lea.sflag [#allocation6], %s314
        %s316 = sand.u32 %s161, 1
        %s317 = smul.addr %s316, 8
        %s318 = scalar_lea.vmem [#allocation10], %s317
        %s319 = smul.u32 2, %s29
        %s320 = smul.u32 32, %s29
        %s321 = smul.u32 16, %s28
        %s322 = smul.u32 2, %s29
        %p323 = scmp.lt.s32.totalorder %s28, 1
        %s324 = scalar_select %p323, %s28, 1
        %s325 = scalar_lea.vmem %s3, %s324
        %p326 = scmp.eq.s32.totalorder %s29, 0
        // Predicated region
        $region49: #{tpu_custom_call.1} parent=35 // pred_check
          %p327 = pneg %p326
        $region50: #{tpu_custom_call.1} parent=35 // pred_check_branch
          %329 = sbr.rel (%p327) target = $region52
        $region51: #{tpu_custom_call.1} parent=35 // pred_region
          %330 = vst [vmem:[#allocation2] sm:$0xff] 0.0
          %vm331 = vcmask 64512
          %332 = vst.msk [vmem:[#allocation3] sm:$0xff] %vm331, 0.0
          %333 = vst.msk [vmem:[#allocation3 + $0x8] sm:$0xff] %vm331, 0.0
          %334 = vst.msk [vmem:[#allocation3 + $0x10] sm:$0xff] %vm331, 0.0
          %335 = vst.msk [vmem:[#allocation3 + $0x18] sm:$0xff] %vm331, 0.0
          %336 = vst.msk [vmem:[#allocation3 + $0x20] sm:$0xff] %vm331, 0.0
          %337 = vst.msk [vmem:[#allocation3 + $0x28] sm:$0xff] %vm331, 0.0
          %338 = vst.msk [vmem:[#allocation3 + $0x30] sm:$0xff] %vm331, 0.0
          %339 = vst.msk [vmem:[#allocation3 + $0x38] sm:$0xff] %vm331, 0.0
          %340 = vst.msk [vmem:[#allocation3 + $0x40] sm:$0xff] %vm331, 0.0
          %341 = vst.msk [vmem:[#allocation3 + $0x48] sm:$0xff] %vm331, 0.0
          %342 = vst.msk [vmem:[#allocation3 + $0x50] sm:$0xff] %vm331, 0.0
          %343 = vst.msk [vmem:[#allocation3 + $0x58] sm:$0xff] %vm331, 0.0
          %344 = vst.msk [vmem:[#allocation3 + $0x60] sm:$0xff] %vm331, 0.0
          %345 = vst.msk [vmem:[#allocation3 + $0x68] sm:$0xff] %vm331, 0.0
          %346 = vst.msk [vmem:[#allocation3 + $0x70] sm:$0xff] %vm331, 0.0
          %347 = vst.msk [vmem:[#allocation3 + $0x78] sm:$0xff] %vm331, 0.0
        $region52: #{tpu_custom_call.1} parent=35 // pred_fallthru
          _
        %v348 = vld [vmem:[#allocation4] sm:$0xff]
        %v349 = vld [vmem:[#allocation4 + $0x8] sm:$0xff]
        %v350 = vld [vmem:[#allocation2] sm:$0xff]
        %v351 = vld [vmem:[%s277] sm:$0xff]
        %v352 = vld [vmem:[%s277 + $0x8] sm:$0xff]
        %v353 = vld [vmem:[%s277 + $0x10] sm:$0xff]
        %v354 = vld [vmem:[%s277 + $0x18] sm:$0xff]
        %v355 = vld [vmem:[%s277 + $0x20] sm:$0xff]
        %v356 = vld [vmem:[%s277 + $0x28] sm:$0xff]
        %v357 = vld [vmem:[%s277 + $0x30] sm:$0xff]
        %v358 = vld [vmem:[%s277 + $0x38] sm:$0xff]
        %v359 = vld [vmem:[%s277 + $0x40] sm:$0xff]
        %v360 = vld [vmem:[%s277 + $0x48] sm:$0xff]
        %v361 = vld [vmem:[%s277 + $0x50] sm:$0xff]
        %v362 = vld [vmem:[%s277 + $0x58] sm:$0xff]
        %v363 = vld [vmem:[%s277 + $0x60] sm:$0xff]
        %v364 = vld [vmem:[%s277 + $0x68] sm:$0xff]
        %v365 = vld [vmem:[%s277 + $0x70] sm:$0xff]
        %v366 = vld [vmem:[%s277 + $0x78] sm:$0xff]
        %v367 = vld [vmem:[%s277 + $0x80] sm:$0xff]
        %v368 = vld [vmem:[%s277 + $0x88] sm:$0xff]
        %v369 = vld [vmem:[%s277 + $0x90] sm:$0xff]
        %v370 = vld [vmem:[%s277 + $0x98] sm:$0xff]
        %v371 = vld [vmem:[%s277 + $0xa0] sm:$0xff]
        %v372 = vld [vmem:[%s277 + $0xa8] sm:$0xff]
        %v373 = vld [vmem:[%s277 + $0xb0] sm:$0xff]
        %v374 = vld [vmem:[%s277 + $0xb8] sm:$0xff]
        %v375 = vld [vmem:[%s277 + $0xc0] sm:$0xff]
        %v376 = vld [vmem:[%s277 + $0xc8] sm:$0xff]
        %v377 = vld [vmem:[%s277 + $0xd0] sm:$0xff]
        %v378 = vld [vmem:[%s277 + $0xd8] sm:$0xff]
        %v379 = vld [vmem:[%s277 + $0xe0] sm:$0xff]
        %v380 = vld [vmem:[%s277 + $0xe8] sm:$0xff]
        %v381 = vld [vmem:[%s277 + $0xf0] sm:$0xff]
        %v382 = vld [vmem:[%s277 + $0xf8] sm:$0xff]
        %383 = vmatprep.subr.mxu0 0.0
        %384 = vmatpush1.msra.mxu0 %v366
        %385 = vmatprep.subr.mxu0 0.0
        %386 = vmatpush1.msra.mxu0 %v365
        %387 = vmatprep.subr.mxu0 0.0
        %388 = vmatpush1.msra.mxu0 %v364
        %389 = vmatprep.subr.mxu0 0.0
        %390 = vmatpush1.msra.mxu0 %v363
        %391 = vmatprep.subr.mxu0 0.0
        %392 = vmatpush1.msra.mxu0 %v362
        %393 = vmatprep.subr.mxu0 0.0
        %394 = vmatpush1.msra.mxu0 %v361
        %395 = vmatprep.subr.mxu0 0.0
        %396 = vmatpush1.msra.mxu0 %v360
        %397 = vmatprep.subr.mxu0 0.0
        %398 = vmatpush1.msra.mxu0 %v359
        %399 = vmatprep.subr.mxu0 0.0
        %400 = vmatpush1.msra.mxu0 %v358
        %401 = vmatprep.subr.mxu0 0.0
        %402 = vmatpush1.msra.mxu0 %v357
        %403 = vmatprep.subr.mxu0 0.0
        %404 = vmatpush1.msra.mxu0 %v356
        %405 = vmatprep.subr.mxu0 0.0
        %406 = vmatpush1.msra.mxu0 %v355
        %407 = vmatprep.subr.mxu0 0.0
        %408 = vmatpush1.msra.mxu0 %v354
        %409 = vmatprep.subr.mxu0 0.0
        %410 = vmatpush1.msra.mxu0 %v353
        %411 = vmatprep.subr.mxu0 0.0
        %412 = vmatpush1.msra.mxu0 %v352
        %413 = vmatprep.subr.mxu0 0.0
        %414 = vmatpush1.msra.mxu0 %v351
        %415 = vmatprep.subr.mxu0 0.0
        %416 = vmatpush2.msra.mxu0 %v382
        %417 = vmatprep.subr.mxu0 0.0
        %418 = vmatpush2.msra.mxu0 %v381
        %419 = vmatprep.subr.mxu0 0.0
        %420 = vmatpush2.msra.mxu0 %v380
        %421 = vmatprep.subr.mxu0 0.0
        %422 = vmatpush2.msra.mxu0 %v379
        %423 = vmatprep.subr.mxu0 0.0
        %424 = vmatpush2.msra.mxu0 %v378
        %425 = vmatprep.subr.mxu0 0.0
        %426 = vmatpush2.msra.mxu0 %v377
        %427 = vmatprep.subr.mxu0 0.0
        %428 = vmatpush2.msra.mxu0 %v376
        %429 = vmatprep.subr.mxu0 0.0
        %430 = vmatpush2.msra.mxu0 %v375
        %431 = vmatprep.subr.mxu0 0.0
        %432 = vmatpush2.msra.mxu0 %v374
        %433 = vmatprep.subr.mxu0 0.0
        %434 = vmatpush2.msra.mxu0 %v373
        %435 = vmatprep.subr.mxu0 0.0
        %436 = vmatpush2.msra.mxu0 %v372
        %437 = vmatprep.subr.mxu0 0.0
        %438 = vmatpush2.msra.mxu0 %v371
        %439 = vmatprep.subr.mxu0 0.0
        %440 = vmatpush2.msra.mxu0 %v370
        %441 = vmatprep.subr.mxu0 0.0
        %442 = vmatpush2.msra.mxu0 %v369
        %443 = vmatprep.subr.mxu0 0.0
        %444 = vmatpush2.msra.mxu0 %v368
        %445 = vmatprep.subr.mxu0 0.0
        %446 = vmatpush2.msra.mxu0 %v367
        %447 = vmatprep.mubr.f32.mxu0 %v349
        %448 = vmatmul.mubr.f32.gmra.mxu0 %v348
        %v449 = vpop.f32.mrf.mxu0
        %v450 = vadd.f32 0.0, %v449
        %v451 = vpop.f32.mrf.mxu0
        %452 = vdwg.mxu0
        %v453 = vadd.f32 %v350, %v450
        %454 = vst [vmem:[#allocation2] sm:$0xff] %v453
        %v455 = vld [vmem:[#allocation3] sm:$0xff]
        %v456 = vld [vmem:[#allocation3 + $0x8] sm:$0xff]
        %v457 = vld [vmem:[#allocation3 + $0x10] sm:$0xff]
        %v458 = vld [vmem:[#allocation3 + $0x18] sm:$0xff]
        %v459 = vld [vmem:[#allocation3 + $0x20] sm:$0xff]
        %v460 = vld [vmem:[#allocation3 + $0x28] sm:$0xff]
        %v461 = vld [vmem:[#allocation3 + $0x30] sm:$0xff]
        %v462 = vld [vmem:[#allocation3 + $0x38] sm:$0xff]
        %v463 = vld [vmem:[#allocation3 + $0x40] sm:$0xff]
        %v464 = vld [vmem:[#allocation3 + $0x48] sm:$0xff]
        %v465 = vld [vmem:[#allocation3 + $0x50] sm:$0xff]
        %v466 = vld [vmem:[#allocation3 + $0x58] sm:$0xff]
        %v467 = vld [vmem:[#allocation3 + $0x60] sm:$0xff]
        %v468 = vld [vmem:[#allocation3 + $0x68] sm:$0xff]
        %v469 = vld [vmem:[#allocation3 + $0x70] sm:$0xff]
        %v470 = vld [vmem:[#allocation3 + $0x78] sm:$0xff]
        %v471 = vld [vmem:[%s286] sm:$0xff]
        %v472 = vld [vmem:[%s286 + $0x8] sm:$0xff]
        %v473 = vld [vmem:[%s286 + $0x10] sm:$0xff]
        %v474 = vld [vmem:[%s286 + $0x18] sm:$0xff]
        %v475 = vld [vmem:[%s286 + $0x20] sm:$0xff]
        %v476 = vld [vmem:[%s286 + $0x28] sm:$0xff]
        %v477 = vld [vmem:[%s286 + $0x30] sm:$0xff]
        %v478 = vld [vmem:[%s286 + $0x38] sm:$0xff]
        %v479 = vld [vmem:[%s286 + $0x40] sm:$0xff]
        %v480 = vld [vmem:[%s286 + $0x48] sm:$0xff]
        %v481 = vld [vmem:[%s286 + $0x50] sm:$0xff]
        %v482 = vld [vmem:[%s286 + $0x58] sm:$0xff]
        %v483 = vld [vmem:[%s286 + $0x60] sm:$0xff]
        %v484 = vld [vmem:[%s286 + $0x68] sm:$0xff]
        %v485 = vld [vmem:[%s286 + $0x70] sm:$0xff]
        %v486 = vld [vmem:[%s286 + $0x78] sm:$0xff]
        %v487 = vld [vmem:[%s286 + $0x80] sm:$0xff]
        %v488 = vld [vmem:[%s286 + $0x88] sm:$0xff]
        %v489 = vld [vmem:[%s286 + $0x90] sm:$0xff]
        %v490 = vld [vmem:[%s286 + $0x98] sm:$0xff]
        %v491 = vld [vmem:[%s286 + $0xa0] sm:$0xff]
        %v492 = vld [vmem:[%s286 + $0xa8] sm:$0xff]
        %v493 = vld [vmem:[%s286 + $0xb0] sm:$0xff]
        %v494 = vld [vmem:[%s286 + $0xb8] sm:$0xff]
        %v495 = vld [vmem:[%s286 + $0xc0] sm:$0xff]
        %v496 = vld [vmem:[%s286 + $0xc8] sm:$0xff]
        %v497 = vld [vmem:[%s286 + $0xd0] sm:$0xff]
        %v498 = vld [vmem:[%s286 + $0xd8] sm:$0xff]
        %v499 = vld [vmem:[%s286 + $0xe0] sm:$0xff]
        %v500 = vld [vmem:[%s286 + $0xe8] sm:$0xff]
        %v501 = vld [vmem:[%s286 + $0xf0] sm:$0xff]
        %v502 = vld [vmem:[%s286 + $0xf8] sm:$0xff]
        %503 = vmatprep.subr.mxu0 0.0
        %504 = vmatpush1.xpose.msra.mxu0 0.0
        %505 = vmatprep.subr.mxu0 0.0
        %506 = vmatpush1.xpose.msra.mxu0 0.0
        %507 = vmatprep.subr.mxu0 0.0
        %508 = vmatpush1.xpose.msra.mxu0 0.0
        %509 = vmatprep.subr.mxu0 0.0
        %510 = vmatpush1.xpose.msra.mxu0 0.0
        %511 = vmatprep.subr.mxu0 0.0
        %512 = vmatpush1.xpose.msra.mxu0 0.0
        %513 = vmatprep.subr.mxu0 0.0
        %514 = vmatpush1.xpose.msra.mxu0 0.0
        %515 = vmatprep.subr.mxu0 0.0
        %516 = vmatpush1.xpose.msra.mxu0 0.0
        %517 = vmatprep.subr.mxu0 0.0
        %518 = vmatpush1.xpose.msra.mxu0 0.0
        %519 = vmatprep.subr.mxu0 0.0
        %520 = vmatpush1.xpose.msra.mxu0 0.0
        %521 = vmatprep.subr.mxu0 0.0
        %522 = vmatpush1.xpose.msra.mxu0 0.0
        %523 = vmatprep.subr.mxu0 0.0
        %524 = vmatpush1.xpose.msra.mxu0 0.0
        %525 = vmatprep.subr.mxu0 0.0
        %526 = vmatpush1.xpose.msra.mxu0 0.0
        %527 = vmatprep.subr.mxu0 0.0
        %528 = vmatpush1.xpose.msra.mxu0 0.0
        %529 = vmatprep.subr.mxu0 0.0
        %530 = vmatpush1.xpose.msra.mxu0 0.0
        %531 = vmatprep.subr.mxu0 0.0
        %532 = vmatpush1.xpose.msra.mxu0 0.0
        %533 = vmatprep.subr.mxu0 %v349
        %534 = vmatpush1.xpose.msra.mxu0 %v348
        %535 = vmatprep.subr.mxu0 0.0
        %536 = vmatpush2.xpose.msra.mxu0 0.0
        %537 = vmatprep.subr.mxu0 0.0
        %538 = vmatpush2.xpose.msra.mxu0 0.0
        %539 = vmatprep.subr.mxu0 0.0
        %540 = vmatpush2.xpose.msra.mxu0 0.0
        %541 = vmatprep.subr.mxu0 0.0
        %542 = vmatpush2.xpose.msra.mxu0 0.0
        %543 = vmatprep.subr.mxu0 0.0
        %544 = vmatpush2.xpose.msra.mxu0 0.0
        %545 = vmatprep.subr.mxu0 0.0
        %546 = vmatpush2.xpose.msra.mxu0 0.0
        %547 = vmatprep.subr.mxu0 0.0
        %548 = vmatpush2.xpose.msra.mxu0 0.0
        %549 = vmatprep.subr.mxu0 0.0
        %550 = vmatpush2.xpose.msra.mxu0 0.0
        %551 = vmatprep.subr.mxu0 0.0
        %552 = vmatpush2.xpose.msra.mxu0 0.0
        %553 = vmatprep.subr.mxu0 0.0
        %554 = vmatpush2.xpose.msra.mxu0 0.0
        %555 = vmatprep.subr.mxu0 0.0
        %556 = vmatpush2.xpose.msra.mxu0 0.0
        %557 = vmatprep.subr.mxu0 0.0
        %558 = vmatpush2.xpose.msra.mxu0 0.0
        %559 = vmatprep.subr.mxu0 0.0
        %560 = vmatpush2.xpose.msra.mxu0 0.0
        %561 = vmatprep.subr.mxu0 0.0
        %562 = vmatpush2.xpose.msra.mxu0 0.0
        %563 = vmatprep.subr.mxu0 0.0
        %564 = vmatpush2.xpose.msra.mxu0 0.0
        %565 = vmatprep.subr.mxu0 0.0
        %566 = vmatpush2.xpose.msra.mxu0 0.0
        %567 = vmatprep.mubr.f32.mxu0 %v472
        %568 = vmatmul.mubr.f32.gmra.mxu0 %v471
        %v569 = vpop.f32.mrf.mxu0
        %v570 = vadd.f32 0.0, %v569
        %v571 = vpop.f32.mrf.mxu0
        %572 = vmatprep.mubr.f32.mxu0 %v474
        %573 = vmatmul.mubr.f32.gmra.mxu0 %v473
        %v574 = vpop.f32.mrf.mxu0
        %v575 = vadd.f32 0.0, %v574
        %v576 = vpop.f32.mrf.mxu0
        %577 = vmatprep.mubr.f32.mxu0 %v476
        %578 = vmatmul.mubr.f32.gmra.mxu0 %v475
        %v579 = vpop.f32.mrf.mxu0
        %v580 = vadd.f32 0.0, %v579
        %v581 = vpop.f32.mrf.mxu0
        %582 = vmatprep.mubr.f32.mxu0 %v478
        %583 = vmatmul.mubr.f32.gmra.mxu0 %v477
        %v584 = vpop.f32.mrf.mxu0
        %v585 = vadd.f32 0.0, %v584
        %v586 = vpop.f32.mrf.mxu0
        %587 = vmatprep.mubr.f32.mxu0 %v480
        %588 = vmatmul.mubr.f32.gmra.mxu0 %v479
        %v589 = vpop.f32.mrf.mxu0
        %v590 = vadd.f32 0.0, %v589
        %v591 = vpop.f32.mrf.mxu0
        %592 = vmatprep.mubr.f32.mxu0 %v482
        %593 = vmatmul.mubr.f32.gmra.mxu0 %v481
        %v594 = vpop.f32.mrf.mxu0
        %v595 = vadd.f32 0.0, %v594
        %v596 = vpop.f32.mrf.mxu0
        %597 = vmatprep.mubr.f32.mxu0 %v484
        %598 = vmatmul.mubr.f32.gmra.mxu0 %v483
        %v599 = vpop.f32.mrf.mxu0
        %v600 = vadd.f32 0.0, %v599
        %v601 = vpop.f32.mrf.mxu0
        %602 = vmatprep.mubr.f32.mxu0 %v486
        %603 = vmatmul.mubr.f32.gmra.mxu0 %v485
        %v604 = vpop.f32.mrf.mxu0
        %v605 = vadd.f32 0.0, %v604
        %v606 = vpop.f32.mrf.mxu0
        %607 = vmatprep.mubr.f32.mxu0 %v488
        %608 = vmatmul.mubr.f32.gmra.mxu0 %v487
        %v609 = vpop.f32.mrf.mxu0
        %v610 = vadd.f32 0.0, %v609
        %v611 = vpop.f32.mrf.mxu0
        %612 = vmatprep.mubr.f32.mxu0 %v490
        %613 = vmatmul.mubr.f32.gmra.mxu0 %v489
        %v614 = vpop.f32.mrf.mxu0
        %v615 = vadd.f32 0.0, %v614
        %v616 = vpop.f32.mrf.mxu0
        %617 = vmatprep.mubr.f32.mxu0 %v492
        %618 = vmatmul.mubr.f32.gmra.mxu0 %v491
        %v619 = vpop.f32.mrf.mxu0
        %v620 = vadd.f32 0.0, %v619
        %v621 = vpop.f32.mrf.mxu0
        %622 = vmatprep.mubr.f32.mxu0 %v494
        %623 = vmatmul.mubr.f32.gmra.mxu0 %v493
        %v624 = vpop.f32.mrf.mxu0
        %v625 = vadd.f32 0.0, %v624
        %v626 = vpop.f32.mrf.mxu0
        %627 = vmatprep.mubr.f32.mxu0 %v496
        %628 = vmatmul.mubr.f32.gmra.mxu0 %v495
        %v629 = vpop.f32.mrf.mxu0
        %v630 = vadd.f32 0.0, %v629
        %v631 = vpop.f32.mrf.mxu0
        %632 = vmatprep.mubr.f32.mxu0 %v498
        %633 = vmatmul.mubr.f32.gmra.mxu0 %v497
        %v634 = vpop.f32.mrf.mxu0
        %v635 = vadd.f32 0.0, %v634
        %v636 = vpop.f32.mrf.mxu0
        %637 = vmatprep.mubr.f32.mxu0 %v500
        %638 = vmatmul.mubr.f32.gmra.mxu0 %v499
        %v639 = vpop.f32.mrf.mxu0
        %v640 = vadd.f32 0.0, %v639
        %v641 = vpop.f32.mrf.mxu0
        %642 = vmatprep.mubr.f32.mxu0 %v502
        %643 = vmatmul.mubr.f32.gmra.mxu0 %v501
        %v644 = vpop.f32.mrf.mxu0
        %v645 = vadd.f32 0.0, %v644
        %v646 = vpop.f32.mrf.mxu0
        %647 = vdwg.mxu0
        %v648 = vadd.f32 %v455, %v570
        %v649 = vadd.f32 %v456, %v575
        %v650 = vadd.f32 %v457, %v580
        %v651 = vadd.f32 %v458, %v585
        %v652 = vadd.f32 %v459, %v590
        %v653 = vadd.f32 %v460, %v595
        %v654 = vadd.f32 %v461, %v600
        %v655 = vadd.f32 %v462, %v605
        %v656 = vadd.f32 %v463, %v610
        %v657 = vadd.f32 %v464, %v615
        %v658 = vadd.f32 %v465, %v620
        %v659 = vadd.f32 %v466, %v625
        %v660 = vadd.f32 %v467, %v630
        %v661 = vadd.f32 %v468, %v635
        %v662 = vadd.f32 %v469, %v640
        %v663 = vadd.f32 %v470, %v645
        %vm664 = vcmask 64512
        %665 = vst.msk [vmem:[#allocation3] sm:$0xff] %vm664, %v648
        %666 = vst.msk [vmem:[#allocation3 + $0x8] sm:$0xff] %vm664, %v649
        %667 = vst.msk [vmem:[#allocation3 + $0x10] sm:$0xff] %vm664, %v650
        %668 = vst.msk [vmem:[#allocation3 + $0x18] sm:$0xff] %vm664, %v651
        %669 = vst.msk [vmem:[#allocation3 + $0x20] sm:$0xff] %vm664, %v652
        %670 = vst.msk [vmem:[#allocation3 + $0x28] sm:$0xff] %vm664, %v653
        %671 = vst.msk [vmem:[#allocation3 + $0x30] sm:$0xff] %vm664, %v654
        %672 = vst.msk [vmem:[#allocation3 + $0x38] sm:$0xff] %vm664, %v655
        %673 = vst.msk [vmem:[#allocation3 + $0x40] sm:$0xff] %vm664, %v656
        %674 = vst.msk [vmem:[#allocation3 + $0x48] sm:$0xff] %vm664, %v657
        %675 = vst.msk [vmem:[#allocation3 + $0x50] sm:$0xff] %vm664, %v658
        %676 = vst.msk [vmem:[#allocation3 + $0x58] sm:$0xff] %vm664, %v659
        %677 = vst.msk [vmem:[#allocation3 + $0x60] sm:$0xff] %vm664, %v660
        %678 = vst.msk [vmem:[#allocation3 + $0x68] sm:$0xff] %vm664, %v661
        %679 = vst.msk [vmem:[#allocation3 + $0x70] sm:$0xff] %vm664, %v662
        %680 = vst.msk [vmem:[#allocation3 + $0x78] sm:$0xff] %vm664, %v663
        // Predicated region
        $region53: #{tpu_custom_call.1} parent=35 // pred_check
          %p681 = pneg %p326
        $region54: #{tpu_custom_call.1} parent=35 // pred_check_branch
          %683 = sbr.rel (%p681) target = $region56
        $region55: #{tpu_custom_call.1} parent=35 // pred_region
          %v684 = vld [vmem:[#allocation2] sm:$0xff]
          %v685 = vld [vmem:[#allocation3] sm:$0xff]
          %v686 = vld [vmem:[#allocation3 + $0x8] sm:$0xff]
          %v687 = vld [vmem:[#allocation3 + $0x10] sm:$0xff]
          %v688 = vld [vmem:[#allocation3 + $0x18] sm:$0xff]
          %v689 = vld [vmem:[#allocation3 + $0x20] sm:$0xff]
          %v690 = vld [vmem:[#allocation3 + $0x28] sm:$0xff]
          %v691 = vld [vmem:[#allocation3 + $0x30] sm:$0xff]
          %v692 = vld [vmem:[#allocation3 + $0x38] sm:$0xff]
          %v693 = vld [vmem:[#allocation3 + $0x40] sm:$0xff]
          %v694 = vld [vmem:[#allocation3 + $0x48] sm:$0xff]
          %v695 = vld [vmem:[#allocation3 + $0x50] sm:$0xff]
          %v696 = vld [vmem:[#allocation3 + $0x58] sm:$0xff]
          %v697 = vld [vmem:[#allocation3 + $0x60] sm:$0xff]
          %v698 = vld [vmem:[#allocation3 + $0x68] sm:$0xff]
          %v699 = vld [vmem:[#allocation3 + $0x70] sm:$0xff]
          %v700 = vld [vmem:[#allocation3 + $0x78] sm:$0xff]
          %701 = vxpose.xlu0.b32.start [1/16] %v685, 128
          %702 = vxpose.xlu0.b32.cont [2/16] %v686, 128
          %703 = vxpose.xlu0.b32.cont [3/16] %v687, 128
          %704 = vxpose.xlu0.b32.cont [4/16] %v688, 128
          %705 = vxpose.xlu0.b32.cont [5/16] %v689, 128
          %706 = vxpose.xlu0.b32.cont [6/16] %v690, 128
          %707 = vxpose.xlu0.b32.cont [7/16] %v691, 128
          %708 = vxpose.xlu0.b32.cont [8/16] %v692, 128
          %709 = vxpose.xlu0.b32.cont [9/16] %v693, 128
          %710 = vxpose.xlu0.b32.cont [10/16] %v694, 128
          %711 = vxpose.xlu0.b32.cont [11/16] %v695, 128
          %712 = vxpose.xlu0.b32.cont [12/16] %v696, 128
          %713 = vxpose.xlu0.b32.cont [13/16] %v697, 128
          %714 = vxpose.xlu0.b32.cont [14/16] %v698, 128
          %715 = vxpose.xlu0.b32.cont [15/16] %v699, 128
          %716 = vxpose.xlu0.b32.end [16/16] %v700, 128
          %v717 = vpop.trf.xlu0
          %v718 = vpop.trf.xlu0
          %v719 = vpop.trf.xlu0
          %v720 = vpop.trf.xlu0
          %v721 = vpop.trf.xlu0
          %v722 = vpop.trf.xlu0
          %v723 = vpop.trf.xlu0
          %v724 = vpop.trf.xlu0
          %v725 = vpop.trf.xlu0
          %v726 = vpop.trf.xlu0
          %v727 = vpop.trf.xlu0
          %v728 = vpop.trf.xlu0
          %v729 = vpop.trf.xlu0
          %v730 = vpop.trf.xlu0
          %v731 = vpop.trf.xlu0
          %v732 = vpop.trf.xlu0
          %v733 = vadd.f32 %v684, %v717
          %v734 = vmul.f32 %v733, 0.5
          %v735 = vld [vmem:[%s325] sm:$0x1]
          %v737 = vlaneseq
          %v738 = vshrl.u32 %v737, 7
          %v739 = vsub.s32 0, %v738
          %v740 = vrot.slane %v735, %v739
          %v742 = vadd.f32 %v734, %v740
          %743 = vst [vmem:[%s318] sm:$0xff] %v742
        $region56: #{tpu_custom_call.1} parent=35 // pred_fallthru
          _
        %s744 = sand.u32 %s161, 1
        %s745 = scalar_lea.sflag [#allocation6], %s744
        %s746 = sand.u32 %s161, 1
        %s747 = smul.addr %s746, 8
        %s748 = scalar_lea.vmem [#allocation10], %s747
        // Predicated region
        $region57: #{tpu_custom_call.1} parent=35 // pred_check
          %p749 = pneg %p171
        $region58: #{tpu_custom_call.1} parent=35 // pred_check_branch
          %751 = sbr.rel (%p749) target = $region60
        $region59: #{tpu_custom_call.1} parent=35 // pred_region
          %s753 = ssub.s32 128, 128
          %754 = vsyncadd %s745, %s753
          %s755 = smul.addr %s27, 2
          %s756 = sadd.s32 %s28, %s755
          %s757 = smul.addr %s756, 128
          %s758 = scalar_lea.hbm %s4, %s757
          %s760 = sshll.u32 %s748, 4
          %s761 = int_to_ptr.vmem [resolvable:$true] %s760
          %763 = dma.vmem_to_hbm [thread:$0]  %s761, 128, %s758, %s745
        $region60: #{tpu_custom_call.1} parent=35 // pred_fallthru
          _
      $region36: #{tpu_custom_call.1} parent=5 // pred_fallthru
        _
      %p764 = scmp.le.s32.totalorder 2, %s17
      // Predicated region
      $region61: #{tpu_custom_call.1} parent=5 // pred_check
        %p765 = pneg %p764
      $region62: #{tpu_custom_call.1} parent=5 // pred_check_branch
        %767 = sbr.rel (%p765) target = $region64
      $region63: #{tpu_custom_call.1} parent=5 // pred_region
        %s768 = ssub.s32 %s17, 2
        // Predicated region
        $region65: #{tpu_custom_call.1} parent=63 // pred_check
          %p769 = pneg %p177
        $region66: #{tpu_custom_call.1} parent=63 // pred_check_branch
          %771 = sbr.rel (%p769) target = $region68
        $region67: #{tpu_custom_call.1} parent=63 // pred_region
          %s772 = sand.u32 %s162, 1
          %s773 = scalar_lea.sflag [#allocation6], %s772
          %s774 = sand.u32 %s162, 1
          %s775 = smul.addr %s774, 8
          %s776 = scalar_lea.vmem [#allocation10], %s775
          %777 = dma.done %s773, 128
        $region68: #{tpu_custom_call.1} parent=63 // pred_fallthru
          _
      $region64: #{tpu_custom_call.1} parent=5 // pred_fallthru
        _
    $region6: #{tpu_custom_call.1} parent=1 // loop_footer
      %s21 = sadd.s32 1, %s17
    $region7: #{tpu_custom_call.1} parent=1 // loop_footer_branch
      %16 = sbr.rel target = $region3
    $region8: #{tpu_custom_call.1} parent=1 // loop_exit
      _
    %778 = vsyncpa [#allocation5], 1
    %s779 = scalar_lea.sflag [#allocation5], 1
    %780 = vsyncpa %s779, 1
    %781 = vsyncpa [#allocation8], 1
    %s782 = scalar_lea.sflag [#allocation8], 1
    %783 = vsyncpa %s782, 1
    %784 = vsyncpa [#allocation6], 1
    %s785 = scalar_lea.sflag [#allocation6], 1
    %786 = vsyncpa %s785, 1

</llo_original>
